<compile_context>
chip_gen: v7x
topology: tpu7x:2x2x1
jax: 0.10.0
libtpu: 0.0.40
codegen_flags: <defaults>
</compile_context>

<pallas_src>
import functools

import jax
import jax.numpy as jnp
from jax.experimental import pallas as pl
from jax.experimental.pallas import tpu as pltpu

DATA_DIM = 32   # data_shape = (DATA_DIM,)
HIDDEN = 64
LATENT = 16

# Packed, lane-dense output layout (128 lanes wide):
#   [ 0:16)  mu
#   [16:32)  std
#   [32:48)  z
#   [48:80)  loc
#   [80:128) zero pad
OUT_W = 128
OFF_MU = 0
OFF_STD = LATENT
OFF_Z = 2 * LATENT
OFF_LOC = 3 * LATENT
OFF_PAD = 3 * LATENT + DATA_DIM


def _round8(n):
    return ((n + 7) // 8) * 8


def _bf16_dot(a, w):
    # bf16 MXU operands, f32 accumulation (same helper used by kernel & reference)
    return jnp.dot(a.astype(jnp.bfloat16), w.astype(jnp.bfloat16),
                   preferred_element_type=jnp.float32)


def dvae_fwd_kernel(x_ref, eps_ref,
                    we1_ref, be1_ref, whead_ref, bhead_ref,
                    wd_ref, bd_ref, wh_ref, bh_ref, wo_ref, bo_ref,
                    out_ref):
    x = x_ref[...]                                   # (TM, D)  f32
    eps = eps_ref[...]                               # (TM, L)  f32

    # ---- vae.enc : x -> (mu, logvar)  (fused heads: one (H, 2L) matmul) ----
    h1 = jnp.maximum(_bf16_dot(x, we1_ref[...]) + be1_ref[...], 0.0)
    heads = _bf16_dot(h1, whead_ref[...]) + bhead_ref[...]     # (TM, 2L) = mu | logvar
    mu = heads[:, :LATENT]
    logvar = heads[:, LATENT:]

    # ---- qz_x.rsample (K=1), f32 ----
    # TODO(synk): eps could be drawn in-kernel via pltpu.prng_seed +
    # pltpu.stateful_normal to drop the eps HBM stream, but that changes the
    # random stream relative to the jax.random reference, so it is kept as input.
    std = jnp.exp(0.5 * logvar)
    z = mu + std * eps

    # ---- dyn : per-timestep linear + tanh ----
    zd = jnp.tanh(_bf16_dot(z, wd_ref[...]) + bd_ref[...])

    # ---- vae.dec : zd -> loc ----
    h2 = jnp.maximum(_bf16_dot(zd, wh_ref[...]) + bh_ref[...], 0.0)
    loc = _bf16_dot(h2, wo_ref[...]) + bo_ref[...]

    # ---- direct slice stores into the lane-dense 128-wide output block ----
    # (no concatenate: avoids an extra (TM,128) f32 temp + full-block copy)
    out_ref[:, OFF_MU:OFF_MU + LATENT] = mu
    out_ref[:, OFF_STD:OFF_STD + LATENT] = std
    out_ref[:, OFF_Z:OFF_Z + LATENT] = z
    out_ref[:, OFF_LOC:OFF_LOC + DATA_DIM] = loc
    out_ref[:, OFF_PAD:] = jnp.zeros((x.shape[0], OUT_W - OFF_PAD), jnp.float32)


PARAM_SHAPES = [
    (DATA_DIM, HIDDEN), (1, HIDDEN),      # enc fc1
    (HIDDEN, LATENT), (1, LATENT),        # enc mu head
    (HIDDEN, LATENT), (1, LATENT),        # enc logvar head
    (LATENT, LATENT), (1, LATENT),        # dyn
    (LATENT, HIDDEN), (1, HIDDEN),        # dec fc1
    (HIDDEN, DATA_DIM), (1, DATA_DIM),    # dec out (loc)
]


def init_params(key):
    params = []
    for shape in PARAM_SHAPES:
        key, sub = jax.random.split(key)
        fan_in = shape[0] if shape[0] > 1 else 1
        params.append(0.1 * jax.random.normal(sub, shape, jnp.float32) / jnp.sqrt(fan_in))
    return tuple(params)


@functools.partial(jax.jit, static_argnames=("tm",))
def dvae_forward(x, eps, params, tm=4096):
    """DVAE.forward with K=1.

    Returns (qz_x_params, px_z_params, zs):
      qz_x_params = (mu, std)    each (B, T, LATENT)
      px_z_params = (loc, scale) loc is (B, T, DATA_DIM), scale is a scalar 1.0
                    (broadcastable; Normal(loc, 1) -- no materialized ones array)
      zs          = (1, B*T, LATENT)   (rsample(torch.Size([K])) with K=1)
    """
    B, T, D = x.shape
    N = B * T
    xf = x.reshape(N, D)
    epsf = eps.reshape(N, LATENT)

    (we1, be1, wmu, bmu, wlv, blv, wd, bd, wh, bh, wo, bo) = params
    # Fuse the two encoder heads into one matmul.
    whead = jnp.concatenate([wmu, wlv], axis=1)        # (H, 2L)
    bhead = jnp.concatenate([bmu, blv], axis=1)        # (1, 2L)

    bf = jnp.bfloat16
    weights = (we1.astype(bf), be1, whead.astype(bf), bhead,
               wd.astype(bf), bd, wh.astype(bf), bh, wo.astype(bf), bo)

    # Effective tile: multiple of 8 rows (f32 sublanes).  Cap so the grid has
    # at least 2 steps when possible -> megacore sharding on v7x + pipelining;
    # no wrapper-side padding -- Pallas masks the ragged last block.
    n8 = _round8(N)
    tm_eff = min(tm, n8)
    if n8 > 8:
        tm_eff = min(tm_eff, _round8(pl.cdiv(n8, 2)))
    tm_eff = max(8, _round8(tm_eff))

    grid = (pl.cdiv(N, tm_eff),)

    def row_spec(cols):
        return pl.BlockSpec((tm_eff, cols), lambda i: (i, 0))

    def full_spec(arr):
        # Constant index_map -> weights stay VMEM-resident across the grid.
        return pl.BlockSpec(arr.shape, lambda i: (0, 0))

    in_specs = [row_spec(D), row_spec(LATENT)] + [full_spec(w) for w in weights]
    out_specs = row_spec(OUT_W)
    out_shape = jax.ShapeDtypeStruct((N, OUT_W), jnp.float32)

    flops = 2 * N * (DATA_DIM * HIDDEN + HIDDEN * 2 * LATENT +
                     LATENT * LATENT + LATENT * HIDDEN + HIDDEN * DATA_DIM)
    transcendentals = 2 * N * LATENT                  # exp + tanh
    bytes_accessed = N * (DATA_DIM + LATENT + OUT_W) * 4 + 32 * 1024

    packed = pl.pallas_call(
        dvae_fwd_kernel,
        grid=grid,
        in_specs=in_specs,
        out_specs=out_specs,
        out_shape=out_shape,
        compiler_params=pltpu.CompilerParams(dimension_semantics=("parallel",)),
        cost_estimate=pl.CostEstimate(flops=flops,
                                      transcendentals=transcendentals,
                                      bytes_accessed=bytes_accessed),
    )(xf, epsf, *weights)

    mu = packed[:, OFF_MU:OFF_MU + LATENT]
    std = packed[:, OFF_STD:OFF_STD + LATENT]
    z = packed[:, OFF_Z:OFF_Z + LATENT]
    loc = packed[:, OFF_LOC:OFF_LOC + DATA_DIM]

    qz_x_params = (mu.reshape(B, T, LATENT), std.reshape(B, T, LATENT))
    px_z_params = (loc.reshape(B, T, D), jnp.float32(1.0))   # Normal(loc, 1)
    zs = z.reshape(1, N, LATENT)                      # K=1 leading sample dim
    return qz_x_params, px_z_params, zs


def dvae_forward_ref(x, eps, params):
    """Pure-JAX reference (same bf16-at-the-dot numerics as the kernel)."""
    (we1, be1, wmu, bmu, wlv, blv, wd, bd, wh, bh, wo, bo) = params
    B, T, D = x.shape
    xf = x.reshape(-1, D)
    epsf = eps.reshape(-1, LATENT)
    h1 = jnp.maximum(_bf16_dot(xf, we1) + be1, 0.0)
    mu = _bf16_dot(h1, wmu) + bmu
    logvar = _bf16_dot(h1, wlv) + blv
    std = jnp.exp(0.5 * logvar)
    z = mu + std * epsf
    zd = jnp.tanh(_bf16_dot(z, wd) + bd)
    h2 = jnp.maximum(_bf16_dot(zd, wh) + bh, 0.0)
    loc = _bf16_dot(h2, wo) + bo
    return (mu.reshape(B, T, LATENT), std.reshape(B, T, LATENT)), \
           (loc.reshape(B, T, D), jnp.float32(1.0)), \
           z.reshape(1, B * T, LATENT)


def _check(B, T, tm, key):
    k_x, k_eps = jax.random.split(key)
    x = jax.random.normal(k_x, (B, T, DATA_DIM), jnp.float32)
    eps = jax.random.normal(k_eps, (B, T, LATENT), jnp.float32)
    params = init_params(jax.random.PRNGKey(42))

    (qz_mu, qz_std), (px_loc, px_scale), zs = dvae_forward(x, eps, params, tm=tm)
    jax.block_until_ready((qz_mu, qz_std, px_loc, px_scale, zs))

    (rmu, rstd), (rloc, rscale), rzs = dvae_forward_ref(x, eps, params)
    assert jnp.allclose(qz_mu, rmu, atol=5e-4, rtol=5e-4), "mu mismatch"
    assert jnp.allclose(qz_std, rstd, atol=5e-4, rtol=5e-4), "std mismatch"
    assert jnp.allclose(px_loc, rloc, atol=5e-4, rtol=5e-4), "loc mismatch"
    assert jnp.allclose(zs, rzs, atol=5e-4, rtol=5e-4), "zs mismatch"
    assert jnp.allclose(px_scale, 1.0), "scale mismatch"

    assert qz_mu.shape == (B, T, LATENT)
    assert px_loc.shape == (B, T, DATA_DIM)
    assert zs.shape == (1, B * T, LATENT)


if __name__ == "__main__":
    key = jax.random.PRNGKey(0)
    k1, k2, k3 = jax.random.split(key, 3)

    # Small canonical case (N=16 -> tile capped to 8 rows, grid=2).
    _check(B=2, T=8, tm=4096, key=k1)
    # Non-multiple row count, ragged last block (N=111, tm=64 -> tiles of 56, grid=2).
    _check(B=3, T=37, tm=64, key=k2)
    # Medium case with default tm (N=400 -> tiles of 200, grid=2).
    _check(B=4, T=100, tm=4096, key=k3)

    print("KERNEL_OK")
</pallas_src>

<mosaic_0001>
module attributes {stable_mosaic.version = 11 : i64} {
  func.func @dvae_fwd_kernel(%arg0: i32, %arg1: memref<8x32xf32, #tpu.memory_space<vmem>>, %arg2: memref<8x16xf32, #tpu.memory_space<vmem>>, %arg3: memref<32x64xbf16, #tpu.memory_space<vmem>>, %arg4: memref<1x64xf32, #tpu.memory_space<vmem>>, %arg5: memref<64x32xbf16, #tpu.memory_space<vmem>>, %arg6: memref<1x32xf32, #tpu.memory_space<vmem>>, %arg7: memref<16x16xbf16, #tpu.memory_space<vmem>>, %arg8: memref<1x16xf32, #tpu.memory_space<vmem>>, %arg9: memref<16x64xbf16, #tpu.memory_space<vmem>>, %arg10: memref<1x64xf32, #tpu.memory_space<vmem>>, %arg11: memref<64x32xbf16, #tpu.memory_space<vmem>>, %arg12: memref<1x32xf32, #tpu.memory_space<vmem>>, %arg13: memref<8x128xf32, #tpu.memory_space<vmem>>) attributes {dimension_semantics = [#tpu.dimension_semantics<parallel>], iteration_bounds = array<i64: 2>, scalar_prefetch = 0 : i64, scratch_operands = 0 : i64, tpu.core_type = #tpu.core_type<tc>, window_params = [{transform_indices = @transform_0, window_bounds = array<i64: 8, 32>}, {transform_indices = @transform_1, window_bounds = array<i64: 8, 16>}, {pipeline_mode = #tpu.pipeline_mode<synchronous>, transform_indices = @transform_2, window_bounds = array<i64: 32, 64>}, {pipeline_mode = #tpu.pipeline_mode<synchronous>, transform_indices = @transform_3, window_bounds = array<i64: 1, 64>}, {pipeline_mode = #tpu.pipeline_mode<synchronous>, transform_indices = @transform_4, window_bounds = array<i64: 64, 32>}, {pipeline_mode = #tpu.pipeline_mode<synchronous>, transform_indices = @transform_5, window_bounds = array<i64: 1, 32>}, {pipeline_mode = #tpu.pipeline_mode<synchronous>, transform_indices = @transform_6, window_bounds = array<i64: 16, 16>}, {pipeline_mode = #tpu.pipeline_mode<synchronous>, transform_indices = @transform_7, window_bounds = array<i64: 1, 16>}, {pipeline_mode = #tpu.pipeline_mode<synchronous>, transform_indices = @transform_8, window_bounds = array<i64: 16, 64>}, {pipeline_mode = #tpu.pipeline_mode<synchronous>, transform_indices = @transform_9, window_bounds = array<i64: 1, 64>}, {pipeline_mode = #tpu.pipeline_mode<synchronous>, transform_indices = @transform_10, window_bounds = array<i64: 64, 32>}, {pipeline_mode = #tpu.pipeline_mode<synchronous>, transform_indices = @transform_11, window_bounds = array<i64: 1, 32>}, {transform_indices = @transform_12, window_bounds = array<i64: 8, 128>}]} {
    %c0 = arith.constant 0 : index
    %c0_0 = arith.constant 0 : index
    %0 = vector.load %arg1[%c0, %c0_0] : memref<8x32xf32, #tpu.memory_space<vmem>>, vector<8x32xf32>
    %c0_1 = arith.constant 0 : index
    %c0_2 = arith.constant 0 : index
    %1 = vector.load %arg2[%c0_1, %c0_2] : memref<8x16xf32, #tpu.memory_space<vmem>>, vector<8x16xf32>
    %c0_3 = arith.constant 0 : index
    %c0_4 = arith.constant 0 : index
    %2 = vector.load %arg3[%c0_3, %c0_4] : memref<32x64xbf16, #tpu.memory_space<vmem>>, vector<32x64xbf16>
    %3 = arith.truncf %0 : vector<8x32xf32> to vector<8x32xbf16>
    %cst = arith.constant dense<0.000000e+00> : vector<8x64xf32>
    %4 = tpu.matmul %3, %2, %cst {dimension_numbers = #tpu.dot_dimension_numbers<[1], [0], [0], [1], [0, 0, 1, 1], [], []>} : vector<8x32xbf16>, vector<32x64xbf16>, vector<8x64xf32> -> vector<8x64xf32>
    %c0_5 = arith.constant 0 : index
    %c0_6 = arith.constant 0 : index
    %5 = vector.load %arg4[%c0_5, %c0_6] : memref<1x64xf32, #tpu.memory_space<vmem>>, vector<1x64xf32>
    %6 = vector.broadcast %5 : vector<1x64xf32> to vector<8x64xf32>
    %7 = arith.addf %4, %6 : vector<8x64xf32>
    %cst_7 = arith.constant 0.000000e+00 : f32
    %8 = vector.broadcast %cst_7 : f32 to vector<8x64xf32>
    %9 = arith.maximumf %7, %8 : vector<8x64xf32>
    %c0_8 = arith.constant 0 : index
    %c0_9 = arith.constant 0 : index
    %10 = vector.load %arg5[%c0_8, %c0_9] : memref<64x32xbf16, #tpu.memory_space<vmem>>, vector<64x32xbf16>
    %11 = arith.truncf %9 : vector<8x64xf32> to vector<8x64xbf16>
    %cst_10 = arith.constant dense<0.000000e+00> : vector<8x32xf32>
    %12 = tpu.matmul %11, %10, %cst_10 {dimension_numbers = #tpu.dot_dimension_numbers<[1], [0], [0], [1], [0, 0, 1, 1], [], []>} : vector<8x64xbf16>, vector<64x32xbf16>, vector<8x32xf32> -> vector<8x32xf32>
    %c0_11 = arith.constant 0 : index
    %c0_12 = arith.constant 0 : index
    %13 = vector.load %arg6[%c0_11, %c0_12] : memref<1x32xf32, #tpu.memory_space<vmem>>, vector<1x32xf32>
    %14 = vector.broadcast %13 : vector<1x32xf32> to vector<8x32xf32>
    %15 = arith.addf %12, %14 : vector<8x32xf32>
    %16 = vector.extract_strided_slice %15 {offsets = [0, 0], sizes = [8, 16], strides = [1, 1]} : vector<8x32xf32> to vector<8x16xf32>
    %17 = vector.extract_strided_slice %15 {offsets = [0, 16], sizes = [8, 16], strides = [1, 1]} : vector<8x32xf32> to vector<8x16xf32>
    %cst_13 = arith.constant 5.000000e-01 : f32
    %18 = vector.broadcast %cst_13 : f32 to vector<8x16xf32>
    %19 = arith.mulf %18, %17 : vector<8x16xf32>
    %20 = math.exp %19 : vector<8x16xf32>
    %21 = arith.mulf %20, %1 : vector<8x16xf32>
    %22 = arith.addf %16, %21 : vector<8x16xf32>
    %c0_14 = arith.constant 0 : index
    %c0_15 = arith.constant 0 : index
    %23 = vector.load %arg7[%c0_14, %c0_15] : memref<16x16xbf16, #tpu.memory_space<vmem>>, vector<16x16xbf16>
    %24 = arith.truncf %22 : vector<8x16xf32> to vector<8x16xbf16>
    %cst_16 = arith.constant dense<0.000000e+00> : vector<8x16xf32>
    %25 = tpu.matmul %24, %23, %cst_16 {dimension_numbers = #tpu.dot_dimension_numbers<[1], [0], [0], [1], [0, 0, 1, 1], [], []>} : vector<8x16xbf16>, vector<16x16xbf16>, vector<8x16xf32> -> vector<8x16xf32>
    %c0_17 = arith.constant 0 : index
    %c0_18 = arith.constant 0 : index
    %26 = vector.load %arg8[%c0_17, %c0_18] : memref<1x16xf32, #tpu.memory_space<vmem>>, vector<1x16xf32>
    %27 = vector.broadcast %26 : vector<1x16xf32> to vector<8x16xf32>
    %28 = arith.addf %25, %27 : vector<8x16xf32>
    %29 = math.tanh %28 : vector<8x16xf32>
    %c0_19 = arith.constant 0 : index
    %c0_20 = arith.constant 0 : index
    %30 = vector.load %arg9[%c0_19, %c0_20] : memref<16x64xbf16, #tpu.memory_space<vmem>>, vector<16x64xbf16>
    %31 = arith.truncf %29 : vector<8x16xf32> to vector<8x16xbf16>
    %cst_21 = arith.constant dense<0.000000e+00> : vector<8x64xf32>
    %32 = tpu.matmul %31, %30, %cst_21 {dimension_numbers = #tpu.dot_dimension_numbers<[1], [0], [0], [1], [0, 0, 1, 1], [], []>} : vector<8x16xbf16>, vector<16x64xbf16>, vector<8x64xf32> -> vector<8x64xf32>
    %c0_22 = arith.constant 0 : index
    %c0_23 = arith.constant 0 : index
    %33 = vector.load %arg10[%c0_22, %c0_23] : memref<1x64xf32, #tpu.memory_space<vmem>>, vector<1x64xf32>
    %34 = vector.broadcast %33 : vector<1x64xf32> to vector<8x64xf32>
    %35 = arith.addf %32, %34 : vector<8x64xf32>
    %cst_24 = arith.constant 0.000000e+00 : f32
    %36 = vector.broadcast %cst_24 : f32 to vector<8x64xf32>
    %37 = arith.maximumf %35, %36 : vector<8x64xf32>
    %c0_25 = arith.constant 0 : index
    %c0_26 = arith.constant 0 : index
    %38 = vector.load %arg11[%c0_25, %c0_26] : memref<64x32xbf16, #tpu.memory_space<vmem>>, vector<64x32xbf16>
    %39 = arith.truncf %37 : vector<8x64xf32> to vector<8x64xbf16>
    %cst_27 = arith.constant dense<0.000000e+00> : vector<8x32xf32>
    %40 = tpu.matmul %39, %38, %cst_27 {dimension_numbers = #tpu.dot_dimension_numbers<[1], [0], [0], [1], [0, 0, 1, 1], [], []>} : vector<8x64xbf16>, vector<64x32xbf16>, vector<8x32xf32> -> vector<8x32xf32>
    %c0_28 = arith.constant 0 : index
    %c0_29 = arith.constant 0 : index
    %41 = vector.load %arg12[%c0_28, %c0_29] : memref<1x32xf32, #tpu.memory_space<vmem>>, vector<1x32xf32>
    %42 = vector.broadcast %41 : vector<1x32xf32> to vector<8x32xf32>
    %43 = arith.addf %40, %42 : vector<8x32xf32>
    %c0_30 = arith.constant 0 : index
    %c0_31 = arith.constant 0 : index
    %44 = vector.load %arg13[%c0_30, %c0_31] : memref<8x128xf32, #tpu.memory_space<vmem>>, vector<8x16xf32>
    tpu.vector_store %arg13[%c0_30, %c0_31], %16 {strides = array<i32>} : memref<8x128xf32, #tpu.memory_space<vmem>>, vector<8x16xf32>,
    %c0_32 = arith.constant 0 : index
    %c16 = arith.constant 16 : index
    %45 = vector.load %arg13[%c0_32, %c16] : memref<8x128xf32, #tpu.memory_space<vmem>>, vector<8x16xf32>
    tpu.vector_store %arg13[%c0_32, %c16], %20 {strides = array<i32>} : memref<8x128xf32, #tpu.memory_space<vmem>>, vector<8x16xf32>,
    %c0_33 = arith.constant 0 : index
    %c32 = arith.constant 32 : index
    %46 = vector.load %arg13[%c0_33, %c32] : memref<8x128xf32, #tpu.memory_space<vmem>>, vector<8x16xf32>
    tpu.vector_store %arg13[%c0_33, %c32], %22 {strides = array<i32>} : memref<8x128xf32, #tpu.memory_space<vmem>>, vector<8x16xf32>,
    %c0_34 = arith.constant 0 : index
    %c48 = arith.constant 48 : index
    %47 = vector.load %arg13[%c0_34, %c48] : memref<8x128xf32, #tpu.memory_space<vmem>>, vector<8x32xf32>
    tpu.vector_store %arg13[%c0_34, %c48], %43 {strides = array<i32>} : memref<8x128xf32, #tpu.memory_space<vmem>>, vector<8x32xf32>,
    %cst_35 = arith.constant 0.000000e+00 : f32
    %48 = vector.broadcast %cst_35 : f32 to vector<8x48xf32>
    %c0_36 = arith.constant 0 : index
    %c80 = arith.constant 80 : index
    %49 = vector.load %arg13[%c0_36, %c80] : memref<8x128xf32, #tpu.memory_space<vmem>>, vector<8x48xf32>
    tpu.vector_store %arg13[%c0_36, %c80], %48 {strides = array<i32>} : memref<8x128xf32, #tpu.memory_space<vmem>>, vector<8x48xf32>,
    return
  }
  func.func @transform_0(%arg0: i32) -> (i32, i32) {
    %c0_i32 = arith.constant 0 : i32
    %c0_i32_0 = arith.constant 0 : i32
    return %arg0, %c0_i32 : i32, i32
  }
  func.func @transform_1(%arg0: i32) -> (i32, i32) {
    %c0_i32 = arith.constant 0 : i32
    %c0_i32_0 = arith.constant 0 : i32
    return %arg0, %c0_i32 : i32, i32
  }
  func.func @transform_2(%arg0: i32) -> (i32, i32) {
    %c0_i32 = arith.constant 0 : i32
    %c0_i32_0 = arith.constant 0 : i32
    %c0_i32_1 = arith.constant 0 : i32
    return %c0_i32, %c0_i32_0 : i32, i32
  }
  func.func @transform_3(%arg0: i32) -> (i32, i32) {
    %c0_i32 = arith.constant 0 : i32
    %c0_i32_0 = arith.constant 0 : i32
    %c0_i32_1 = arith.constant 0 : i32
    return %c0_i32, %c0_i32_0 : i32, i32
  }
  func.func @transform_4(%arg0: i32) -> (i32, i32) {
    %c0_i32 = arith.constant 0 : i32
    %c0_i32_0 = arith.constant 0 : i32
    %c0_i32_1 = arith.constant 0 : i32
    return %c0_i32, %c0_i32_0 : i32, i32
  }
  func.func @transform_5(%arg0: i32) -> (i32, i32) {
    %c0_i32 = arith.constant 0 : i32
    %c0_i32_0 = arith.constant 0 : i32
    %c0_i32_1 = arith.constant 0 : i32
    return %c0_i32, %c0_i32_0 : i32, i32
  }
  func.func @transform_6(%arg0: i32) -> (i32, i32) {
    %c0_i32 = arith.constant 0 : i32
    %c0_i32_0 = arith.constant 0 : i32
    %c0_i32_1 = arith.constant 0 : i32
    return %c0_i32, %c0_i32_0 : i32, i32
  }
  func.func @transform_7(%arg0: i32) -> (i32, i32) {
    %c0_i32 = arith.constant 0 : i32
    %c0_i32_0 = arith.constant 0 : i32
    %c0_i32_1 = arith.constant 0 : i32
    return %c0_i32, %c0_i32_0 : i32, i32
  }
  func.func @transform_8(%arg0: i32) -> (i32, i32) {
    %c0_i32 = arith.constant 0 : i32
    %c0_i32_0 = arith.constant 0 : i32
    %c0_i32_1 = arith.constant 0 : i32
    return %c0_i32, %c0_i32_0 : i32, i32
  }
  func.func @transform_9(%arg0: i32) -> (i32, i32) {
    %c0_i32 = arith.constant 0 : i32
    %c0_i32_0 = arith.constant 0 : i32
    %c0_i32_1 = arith.constant 0 : i32
    return %c0_i32, %c0_i32_0 : i32, i32
  }
  func.func @transform_10(%arg0: i32) -> (i32, i32) {
    %c0_i32 = arith.constant 0 : i32
    %c0_i32_0 = arith.constant 0 : i32
    %c0_i32_1 = arith.constant 0 : i32
    return %c0_i32, %c0_i32_0 : i32, i32
  }
  func.func @transform_11(%arg0: i32) -> (i32, i32) {
    %c0_i32 = arith.constant 0 : i32
    %c0_i32_0 = arith.constant 0 : i32
    %c0_i32_1 = arith.constant 0 : i32
    return %c0_i32, %c0_i32_0 : i32, i32
  }
  func.func @transform_12(%arg0: i32) -> (i32, i32) {
    %c0_i32 = arith.constant 0 : i32
    %c0_i32_0 = arith.constant 0 : i32
    return %arg0, %c0_i32 : i32, i32
  }
}

</mosaic_0001>

<llo_original>
// kernel: dvae_forward.1
$region0: #{dvae_forward.1}
  #allocation0 [shape = 'u32[]', space=smem, size = 0x4, offset = 0x4, fixed_abs, tag = 'smem constant byte address 0x4 - core index']
  #allocation1 [shape = 'u32[144,128]{1,0:T(1,128)}', space=vmem, size = 0x12000, scoped, tag = 'internal scratch']
  %s0 = inlined_call_operand.vmem [shape: f32[16,32], index: 0, kind: input, shape index: {}]
  %s1 = inlined_call_operand.vmem [shape: f32[16,16], index: 1, kind: input, shape index: {}]
  %s2 = inlined_call_operand.vmem [shape: bf16[32,64], index: 2, kind: input, shape index: {}]
  %s3 = inlined_call_operand.vmem [shape: f32[1,64], index: 3, kind: input, shape index: {}]
  %s4 = inlined_call_operand.vmem [shape: bf16[64,32], index: 4, kind: input, shape index: {}]
  %s5 = inlined_call_operand.vmem [shape: f32[1,32], index: 5, kind: input, shape index: {}]
  %s6 = inlined_call_operand.vmem [shape: bf16[16,16], index: 6, kind: input, shape index: {}]
  %s7 = inlined_call_operand.vmem [shape: f32[1,16], index: 7, kind: input, shape index: {}]
  %s8 = inlined_call_operand.vmem [shape: bf16[16,64], index: 8, kind: input, shape index: {}]
  %s9 = inlined_call_operand.vmem [shape: f32[1,64], index: 9, kind: input, shape index: {}]
  %s10 = inlined_call_operand.vmem [shape: bf16[64,32], index: 10, kind: input, shape index: {}]
  %s11 = inlined_call_operand.vmem [shape: f32[1,32], index: 11, kind: input, shape index: {}]
  %s12 = inlined_call_operand.vmem [shape: f32[16,128], index: 12, kind: output, shape index: {}]
  %s13 = sld [smem:[#allocation0]]
  $region81: #{dvae_forward.1} parent=0
    _
  %s15 = ssub.s32 1, %s13
  %s16 = scalar_select 0, %s15, %s13
  loop: start=0, step=1, limit=4
  $region2: #{dvae_forward.1} parent=0 // loop_pre_header
    _
  $region3: #{dvae_forward.1} parent=0 // loop_header
    %s18 = sphi 0, %s22
    %p19 = scmp.ge.s32.totalorder %s18, 4
    %s28 = sphi 0, %s30
    %s31 = sphi 0, %s28
    %s32 = sphi 0, %s31
    %s48 = sphi 0, %s32
    %s54 = sphi 0, %s56
    %s57 = sphi 0, %s54
    %s58 = sphi 0, %s57
    %s74 = sphi 0, %s58
    %s78 = sphi 0, %s78
    %s80 = sphi 0, %s78
    %s81 = sphi 0, %s80
    %s95 = sphi 0, %s81
    %s99 = sphi 0, %s99
    %s101 = sphi 0, %s99
    %s102 = sphi 0, %s101
    %s116 = sphi 0, %s102
    %s120 = sphi 0, %s120
    %s122 = sphi 0, %s120
    %s123 = sphi 0, %s122
    %s137 = sphi 0, %s123
    %s141 = sphi 0, %s141
    %s143 = sphi 0, %s141
    %s144 = sphi 0, %s143
    %s158 = sphi 0, %s144
    %s162 = sphi 0, %s162
    %s164 = sphi 0, %s162
    %s165 = sphi 0, %s164
    %s179 = sphi 0, %s165
    %s183 = sphi 0, %s183
    %s185 = sphi 0, %s183
    %s186 = sphi 0, %s185
    %s200 = sphi 0, %s186
    %s204 = sphi 0, %s204
    %s206 = sphi 0, %s204
    %s207 = sphi 0, %s206
    %s221 = sphi 0, %s207
    %s225 = sphi 0, %s225
    %s227 = sphi 0, %s225
    %s228 = sphi 0, %s227
    %s242 = sphi 0, %s228
    %s246 = sphi 0, %s246
    %s248 = sphi 0, %s246
    %s249 = sphi 0, %s248
    %s263 = sphi 0, %s249
    %s267 = sphi 0, %s267
    %s269 = sphi 0, %s267
    %s270 = sphi 0, %s269
    %s284 = sphi 0, %s270
    %s290 = sphi 0, %s292
    %s293 = sphi 0, %s290
    %s294 = sphi 0, %s293
    %s310 = sphi 0, %s294
  $region4: #{dvae_forward.1} parent=0 // loop_header_branch
    %21 = sbr.rel (%p19) target = $region8
  $region5: #{dvae_forward.1} parent=0 // loop_body
    %s23 = ssub.s32 %s18, 1
    %s24 = ssub.s32 %s18, 2
    %s25 = sadd.s32 %s18, 1
    %s26 = ssub.s32 %s18, %s25
    %p27 = scmp.eq.s32.totalorder %s26, 0
    %s29 = sadd.s32 %s28, 1
    %s30 = scalar_select %p27, %s28, %s29
    %p33 = pneg %p27
    %p34 = scmp.eq.s32.totalorder %s18, 1
    %p35 = por %p33, %p34
    %p36 = scmp.ne.s32.totalorder %s28, %s31
    %p37 = scmp.eq.s32.totalorder %s18, 0
    %p38 = por %p36, %p37
    %p39 = scmp.ne.s32.totalorder %s28, %s31
    %p40 = scmp.eq.s32.totalorder %s23, 1
    %p41 = por %p39, %p40
    %p42 = scmp.ne.s32.totalorder %s31, %s32
    %p43 = scmp.eq.s32.totalorder %s23, 0
    %p44 = por %p42, %p43
    %p45 = scmp.ne.s32.totalorder %s31, %s32
    %p46 = scmp.eq.s32.totalorder %s24, 1
    %p47 = por %p45, %p46
    %p49 = scmp.ne.s32.totalorder %s32, %s48
    %p50 = scmp.eq.s32.totalorder %s24, 0
    %p51 = por %p49, %p50
    %s52 = ssub.s32 %s18, %s25
    %p53 = scmp.eq.s32.totalorder %s52, 0
    %s55 = sadd.s32 %s54, 1
    %s56 = scalar_select %p53, %s54, %s55
    %p59 = pneg %p53
    %p60 = scmp.eq.s32.totalorder %s18, 1
    %p61 = por %p59, %p60
    %p62 = scmp.ne.s32.totalorder %s54, %s57
    %p63 = scmp.eq.s32.totalorder %s18, 0
    %p64 = por %p62, %p63
    %p65 = scmp.ne.s32.totalorder %s54, %s57
    %p66 = scmp.eq.s32.totalorder %s23, 1
    %p67 = por %p65, %p66
    %p68 = scmp.ne.s32.totalorder %s57, %s58
    %p69 = scmp.eq.s32.totalorder %s23, 0
    %p70 = por %p68, %p69
    %p71 = scmp.ne.s32.totalorder %s57, %s58
    %p72 = scmp.eq.s32.totalorder %s24, 1
    %p73 = por %p71, %p72
    %p75 = scmp.ne.s32.totalorder %s58, %s74
    %p76 = scmp.eq.s32.totalorder %s24, 0
    %p77 = por %p75, %p76
    %s79 = sadd.s32 %s78, 1
    %p82 = scmp.eq.s32.totalorder %s18, 1
    %p83 = scmp.ne.s32.totalorder %s78, %s80
    %p84 = scmp.eq.s32.totalorder %s18, 0
    %p85 = por %p83, %p84
    %p86 = scmp.ne.s32.totalorder %s78, %s80
    %p87 = scmp.eq.s32.totalorder %s23, 1
    %p88 = por %p86, %p87
    %p89 = scmp.ne.s32.totalorder %s80, %s81
    %p90 = scmp.eq.s32.totalorder %s23, 0
    %p91 = por %p89, %p90
    %p92 = scmp.ne.s32.totalorder %s80, %s81
    %p93 = scmp.eq.s32.totalorder %s24, 1
    %p94 = por %p92, %p93
    %p96 = scmp.ne.s32.totalorder %s81, %s95
    %p97 = scmp.eq.s32.totalorder %s24, 0
    %p98 = por %p96, %p97
    %s100 = sadd.s32 %s99, 1
    %p103 = scmp.eq.s32.totalorder %s18, 1
    %p104 = scmp.ne.s32.totalorder %s99, %s101
    %p105 = scmp.eq.s32.totalorder %s18, 0
    %p106 = por %p104, %p105
    %p107 = scmp.ne.s32.totalorder %s99, %s101
    %p108 = scmp.eq.s32.totalorder %s23, 1
    %p109 = por %p107, %p108
    %p110 = scmp.ne.s32.totalorder %s101, %s102
    %p111 = scmp.eq.s32.totalorder %s23, 0
    %p112 = por %p110, %p111
    %p113 = scmp.ne.s32.totalorder %s101, %s102
    %p114 = scmp.eq.s32.totalorder %s24, 1
    %p115 = por %p113, %p114
    %p117 = scmp.ne.s32.totalorder %s102, %s116
    %p118 = scmp.eq.s32.totalorder %s24, 0
    %p119 = por %p117, %p118
    %s121 = sadd.s32 %s120, 1
    %p124 = scmp.eq.s32.totalorder %s18, 1
    %p125 = scmp.ne.s32.totalorder %s120, %s122
    %p126 = scmp.eq.s32.totalorder %s18, 0
    %p127 = por %p125, %p126
    %p128 = scmp.ne.s32.totalorder %s120, %s122
    %p129 = scmp.eq.s32.totalorder %s23, 1
    %p130 = por %p128, %p129
    %p131 = scmp.ne.s32.totalorder %s122, %s123
    %p132 = scmp.eq.s32.totalorder %s23, 0
    %p133 = por %p131, %p132
    %p134 = scmp.ne.s32.totalorder %s122, %s123
    %p135 = scmp.eq.s32.totalorder %s24, 1
    %p136 = por %p134, %p135
    %p138 = scmp.ne.s32.totalorder %s123, %s137
    %p139 = scmp.eq.s32.totalorder %s24, 0
    %p140 = por %p138, %p139
    %s142 = sadd.s32 %s141, 1
    %p145 = scmp.eq.s32.totalorder %s18, 1
    %p146 = scmp.ne.s32.totalorder %s141, %s143
    %p147 = scmp.eq.s32.totalorder %s18, 0
    %p148 = por %p146, %p147
    %p149 = scmp.ne.s32.totalorder %s141, %s143
    %p150 = scmp.eq.s32.totalorder %s23, 1
    %p151 = por %p149, %p150
    %p152 = scmp.ne.s32.totalorder %s143, %s144
    %p153 = scmp.eq.s32.totalorder %s23, 0
    %p154 = por %p152, %p153
    %p155 = scmp.ne.s32.totalorder %s143, %s144
    %p156 = scmp.eq.s32.totalorder %s24, 1
    %p157 = por %p155, %p156
    %p159 = scmp.ne.s32.totalorder %s144, %s158
    %p160 = scmp.eq.s32.totalorder %s24, 0
    %p161 = por %p159, %p160
    %s163 = sadd.s32 %s162, 1
    %p166 = scmp.eq.s32.totalorder %s18, 1
    %p167 = scmp.ne.s32.totalorder %s162, %s164
    %p168 = scmp.eq.s32.totalorder %s18, 0
    %p169 = por %p167, %p168
    %p170 = scmp.ne.s32.totalorder %s162, %s164
    %p171 = scmp.eq.s32.totalorder %s23, 1
    %p172 = por %p170, %p171
    %p173 = scmp.ne.s32.totalorder %s164, %s165
    %p174 = scmp.eq.s32.totalorder %s23, 0
    %p175 = por %p173, %p174
    %p176 = scmp.ne.s32.totalorder %s164, %s165
    %p177 = scmp.eq.s32.totalorder %s24, 1
    %p178 = por %p176, %p177
    %p180 = scmp.ne.s32.totalorder %s165, %s179
    %p181 = scmp.eq.s32.totalorder %s24, 0
    %p182 = por %p180, %p181
    %s184 = sadd.s32 %s183, 1
    %p187 = scmp.eq.s32.totalorder %s18, 1
    %p188 = scmp.ne.s32.totalorder %s183, %s185
    %p189 = scmp.eq.s32.totalorder %s18, 0
    %p190 = por %p188, %p189
    %p191 = scmp.ne.s32.totalorder %s183, %s185
    %p192 = scmp.eq.s32.totalorder %s23, 1
    %p193 = por %p191, %p192
    %p194 = scmp.ne.s32.totalorder %s185, %s186
    %p195 = scmp.eq.s32.totalorder %s23, 0
    %p196 = por %p194, %p195
    %p197 = scmp.ne.s32.totalorder %s185, %s186
    %p198 = scmp.eq.s32.totalorder %s24, 1
    %p199 = por %p197, %p198
    %p201 = scmp.ne.s32.totalorder %s186, %s200
    %p202 = scmp.eq.s32.totalorder %s24, 0
    %p203 = por %p201, %p202
    %s205 = sadd.s32 %s204, 1
    %p208 = scmp.eq.s32.totalorder %s18, 1
    %p209 = scmp.ne.s32.totalorder %s204, %s206
    %p210 = scmp.eq.s32.totalorder %s18, 0
    %p211 = por %p209, %p210
    %p212 = scmp.ne.s32.totalorder %s204, %s206
    %p213 = scmp.eq.s32.totalorder %s23, 1
    %p214 = por %p212, %p213
    %p215 = scmp.ne.s32.totalorder %s206, %s207
    %p216 = scmp.eq.s32.totalorder %s23, 0
    %p217 = por %p215, %p216
    %p218 = scmp.ne.s32.totalorder %s206, %s207
    %p219 = scmp.eq.s32.totalorder %s24, 1
    %p220 = por %p218, %p219
    %p222 = scmp.ne.s32.totalorder %s207, %s221
    %p223 = scmp.eq.s32.totalorder %s24, 0
    %p224 = por %p222, %p223
    %s226 = sadd.s32 %s225, 1
    %p229 = scmp.eq.s32.totalorder %s18, 1
    %p230 = scmp.ne.s32.totalorder %s225, %s227
    %p231 = scmp.eq.s32.totalorder %s18, 0
    %p232 = por %p230, %p231
    %p233 = scmp.ne.s32.totalorder %s225, %s227
    %p234 = scmp.eq.s32.totalorder %s23, 1
    %p235 = por %p233, %p234
    %p236 = scmp.ne.s32.totalorder %s227, %s228
    %p237 = scmp.eq.s32.totalorder %s23, 0
    %p238 = por %p236, %p237
    %p239 = scmp.ne.s32.totalorder %s227, %s228
    %p240 = scmp.eq.s32.totalorder %s24, 1
    %p241 = por %p239, %p240
    %p243 = scmp.ne.s32.totalorder %s228, %s242
    %p244 = scmp.eq.s32.totalorder %s24, 0
    %p245 = por %p243, %p244
    %s247 = sadd.s32 %s246, 1
    %p250 = scmp.eq.s32.totalorder %s18, 1
    %p251 = scmp.ne.s32.totalorder %s246, %s248
    %p252 = scmp.eq.s32.totalorder %s18, 0
    %p253 = por %p251, %p252
    %p254 = scmp.ne.s32.totalorder %s246, %s248
    %p255 = scmp.eq.s32.totalorder %s23, 1
    %p256 = por %p254, %p255
    %p257 = scmp.ne.s32.totalorder %s248, %s249
    %p258 = scmp.eq.s32.totalorder %s23, 0
    %p259 = por %p257, %p258
    %p260 = scmp.ne.s32.totalorder %s248, %s249
    %p261 = scmp.eq.s32.totalorder %s24, 1
    %p262 = por %p260, %p261
    %p264 = scmp.ne.s32.totalorder %s249, %s263
    %p265 = scmp.eq.s32.totalorder %s24, 0
    %p266 = por %p264, %p265
    %s268 = sadd.s32 %s267, 1
    %p271 = scmp.eq.s32.totalorder %s18, 1
    %p272 = scmp.ne.s32.totalorder %s267, %s269
    %p273 = scmp.eq.s32.totalorder %s18, 0
    %p274 = por %p272, %p273
    %p275 = scmp.ne.s32.totalorder %s267, %s269
    %p276 = scmp.eq.s32.totalorder %s23, 1
    %p277 = por %p275, %p276
    %p278 = scmp.ne.s32.totalorder %s269, %s270
    %p279 = scmp.eq.s32.totalorder %s23, 0
    %p280 = por %p278, %p279
    %p281 = scmp.ne.s32.totalorder %s269, %s270
    %p282 = scmp.eq.s32.totalorder %s24, 1
    %p283 = por %p281, %p282
    %p285 = scmp.ne.s32.totalorder %s270, %s284
    %p286 = scmp.eq.s32.totalorder %s24, 0
    %p287 = por %p285, %p286
    %s288 = ssub.s32 %s18, %s25
    %p289 = scmp.eq.s32.totalorder %s288, 0
    %s291 = sadd.s32 %s290, 1
    %s292 = scalar_select %p289, %s290, %s291
    %p295 = pneg %p289
    %p296 = scmp.eq.s32.totalorder %s18, 1
    %p297 = por %p295, %p296
    %p298 = scmp.ne.s32.totalorder %s290, %s293
    %p299 = scmp.eq.s32.totalorder %s18, 0
    %p300 = por %p298, %p299
    %p301 = scmp.ne.s32.totalorder %s290, %s293
    %p302 = scmp.eq.s32.totalorder %s23, 1
    %p303 = por %p301, %p302
    %p304 = scmp.ne.s32.totalorder %s293, %s294
    %p305 = scmp.eq.s32.totalorder %s23, 0
    %p306 = por %p304, %p305
    %p307 = scmp.ne.s32.totalorder %s293, %s294
    %p308 = scmp.eq.s32.totalorder %s24, 1
    %p309 = por %p307, %p308
    %p311 = scmp.ne.s32.totalorder %s294, %s310
    %p312 = scmp.eq.s32.totalorder %s24, 0
    %p313 = por %p311, %p312
    %p314 = scmp.le.s32.totalorder 1, %s18
    %p315 = scmp.lt.s32.totalorder %s18, 3
    %p316 = pnand %p314, %p315
    %p317 = pneg %p316
    // Predicated region
    $region9: #{dvae_forward.1} parent=5 // pred_check
      _
    $region10: #{dvae_forward.1} parent=5 // pred_check_branch
      %319 = sbr.rel (%p316) target = $region12
    $region11: #{dvae_forward.1} parent=5 // pred_region
      %s320 = ssub.s32 %s18, 1
      // Predicated region
      $region13: #{dvae_forward.1} parent=11 // pred_check
        %p321 = pneg %p91
      $region14: #{dvae_forward.1} parent=11 // pred_check_branch
        %323 = sbr.rel (%p321) target = $region16
      $region15: #{dvae_forward.1} parent=11 // pred_region
        _
      $region16: #{dvae_forward.1} parent=11 // pred_fallthru
        _
      // Predicated region
      $region17: #{dvae_forward.1} parent=11 // pred_check
        %p324 = pneg %p112
      $region18: #{dvae_forward.1} parent=11 // pred_check_branch
        %326 = sbr.rel (%p324) target = $region20
      $region19: #{dvae_forward.1} parent=11 // pred_region
        _
      $region20: #{dvae_forward.1} parent=11 // pred_fallthru
        _
      // Predicated region
      $region21: #{dvae_forward.1} parent=11 // pred_check
        %p327 = pneg %p133
      $region22: #{dvae_forward.1} parent=11 // pred_check_branch
        %329 = sbr.rel (%p327) target = $region24
      $region23: #{dvae_forward.1} parent=11 // pred_region
        _
      $region24: #{dvae_forward.1} parent=11 // pred_fallthru
        _
      // Predicated region
      $region25: #{dvae_forward.1} parent=11 // pred_check
        %p330 = pneg %p154
      $region26: #{dvae_forward.1} parent=11 // pred_check_branch
        %332 = sbr.rel (%p330) target = $region28
      $region27: #{dvae_forward.1} parent=11 // pred_region
        _
      $region28: #{dvae_forward.1} parent=11 // pred_fallthru
        _
      // Predicated region
      $region29: #{dvae_forward.1} parent=11 // pred_check
        %p333 = pneg %p175
      $region30: #{dvae_forward.1} parent=11 // pred_check_branch
        %335 = sbr.rel (%p333) target = $region32
      $region31: #{dvae_forward.1} parent=11 // pred_region
        _
      $region32: #{dvae_forward.1} parent=11 // pred_fallthru
        _
      // Predicated region
      $region33: #{dvae_forward.1} parent=11 // pred_check
        %p336 = pneg %p196
      $region34: #{dvae_forward.1} parent=11 // pred_check_branch
        %338 = sbr.rel (%p336) target = $region36
      $region35: #{dvae_forward.1} parent=11 // pred_region
        _
      $region36: #{dvae_forward.1} parent=11 // pred_fallthru
        _
      // Predicated region
      $region37: #{dvae_forward.1} parent=11 // pred_check
        %p339 = pneg %p217
      $region38: #{dvae_forward.1} parent=11 // pred_check_branch
        %341 = sbr.rel (%p339) target = $region40
      $region39: #{dvae_forward.1} parent=11 // pred_region
        _
      $region40: #{dvae_forward.1} parent=11 // pred_fallthru
        _
      // Predicated region
      $region41: #{dvae_forward.1} parent=11 // pred_check
        %p342 = pneg %p238
      $region42: #{dvae_forward.1} parent=11 // pred_check_branch
        %344 = sbr.rel (%p342) target = $region44
      $region43: #{dvae_forward.1} parent=11 // pred_region
        _
      $region44: #{dvae_forward.1} parent=11 // pred_fallthru
        _
      // Predicated region
      $region45: #{dvae_forward.1} parent=11 // pred_check
        %p345 = pneg %p259
      $region46: #{dvae_forward.1} parent=11 // pred_check_branch
        %347 = sbr.rel (%p345) target = $region48
      $region47: #{dvae_forward.1} parent=11 // pred_region
        _
      $region48: #{dvae_forward.1} parent=11 // pred_fallthru
        _
      // Predicated region
      $region49: #{dvae_forward.1} parent=11 // pred_check
        %p348 = pneg %p280
      $region50: #{dvae_forward.1} parent=11 // pred_check_branch
        %350 = sbr.rel (%p348) target = $region52
      $region51: #{dvae_forward.1} parent=11 // pred_region
        _
      $region52: #{dvae_forward.1} parent=11 // pred_fallthru
        _
    $region12: #{dvae_forward.1} parent=5 // pred_fallthru
      _
    %p351 = scmp.lt.s32.totalorder %s18, 2
    // Predicated region
    $region53: #{dvae_forward.1} parent=5 // pred_check
      %p352 = pneg %p351
    $region54: #{dvae_forward.1} parent=5 // pred_check_branch
      %354 = sbr.rel (%p352) target = $region56
    $region55: #{dvae_forward.1} parent=5 // pred_region
      // Predicated region
      $region57: #{dvae_forward.1} parent=55 // pred_check
        %p355 = pneg %p38
      $region58: #{dvae_forward.1} parent=55 // pred_check_branch
        %357 = sbr.rel (%p355) target = $region60
      $region59: #{dvae_forward.1} parent=55 // pred_region
        %p358 = scmp.lt.s32.totalorder %s18, 1
        %s359 = scalar_select %p358, %s18, 1
        %s360 = smul.addr %s359, 8
        %s361 = scalar_lea.vmem %s0, %s360
      $region60: #{dvae_forward.1} parent=55 // pred_fallthru
        _
      // Predicated region
      $region61: #{dvae_forward.1} parent=55 // pred_check
        %p362 = pneg %p64
      $region62: #{dvae_forward.1} parent=55 // pred_check_branch
        %364 = sbr.rel (%p362) target = $region64
      $region63: #{dvae_forward.1} parent=55 // pred_region
        %p365 = scmp.lt.s32.totalorder %s18, 1
        %s366 = scalar_select %p365, %s18, 1
        %s367 = smul.addr %s366, 8
        %s368 = scalar_lea.vmem %s1, %s367
      $region64: #{dvae_forward.1} parent=55 // pred_fallthru
        _
    $region56: #{dvae_forward.1} parent=5 // pred_fallthru
      _
    %p369 = scmp.le.s32.totalorder 1, %s18
    %p370 = scmp.lt.s32.totalorder %s18, 3
    %p371 = pnand %p369, %p370
    %p372 = pneg %p371
    // Predicated region
    $region65: #{dvae_forward.1} parent=5 // pred_check
      _
    $region66: #{dvae_forward.1} parent=5 // pred_check_branch
      %374 = sbr.rel (%p371) target = $region68
    $region67: #{dvae_forward.1} parent=5 // pred_region
      %s375 = ssub.s32 %s18, 1
      %p376 = scmp.lt.s32.totalorder %s23, 1
      %s377 = scalar_select %p376, %s23, 1
      %s378 = smul.addr %s377, 8
      %s379 = scalar_lea.vmem %s0, %s378
      %p380 = pneg %p44
      %p381 = pneg %p41
      %p382 = scmp.lt.s32.totalorder %s23, 1
      %s383 = scalar_select %p382, %s23, 1
      %s384 = smul.addr %s383, 8
      %s385 = scalar_lea.vmem %s1, %s384
      %p386 = pneg %p70
      %p387 = pneg %p67
      %p388 = pneg %p91
      %p389 = pneg %p88
      %p390 = pneg %p112
      %p391 = pneg %p109
      %p392 = pneg %p133
      %p393 = pneg %p130
      %p394 = pneg %p154
      %p395 = pneg %p151
      %p396 = pneg %p175
      %p397 = pneg %p172
      %p398 = pneg %p196
      %p399 = pneg %p193
      %p400 = pneg %p217
      %p401 = pneg %p214
      %p402 = pneg %p238
      %p403 = pneg %p235
      %p404 = pneg %p259
      %p405 = pneg %p256
      %p406 = pneg %p280
      %p407 = pneg %p277
      %p408 = pneg %p306
      %p409 = pneg %p303
      %p410 = scmp.lt.s32.totalorder %s23, 1
      %s411 = scalar_select %p410, %s23, 1
      %s412 = smul.addr %s411, 8
      %s413 = scalar_lea.vmem %s12, %s412
      %p414 = scmp.lt.s32.totalorder %s23, 1
      %s415 = scalar_select %p414, %s23, 1
      %s416 = smul.addr %s415, 8
      %s417 = scalar_lea.vmem %s0, %s416
      %p418 = scmp.lt.s32.totalorder %s23, 1
      %s419 = scalar_select %p418, %s23, 1
      %s420 = smul.addr %s419, 8
      %s421 = scalar_lea.vmem %s1, %s420
      %p422 = scmp.lt.s32.totalorder %s23, 1
      %s423 = scalar_select %p422, %s23, 1
      %s424 = smul.addr %s423, 8
      %s425 = scalar_lea.vmem %s12, %s424
      %v427 = vld [vmem:[%s417] sm:$0xff]
      %v428 = vld [vmem:[%s421] sm:$0xff]
      %v429 = vld [vmem:[%s2] sm:$0xf]
      %v430 = vld [vmem:[%s2 + $0x4] sm:$0xf]
      %v431 = vld [vmem:[%s2 + $0x8] sm:$0xf]
      %v432 = vld [vmem:[%s2 + $0xc] sm:$0xf]
      %v433 = vpack.c.bf16 %v427, %v427
      %v434 = vld [vmem:[%s3] sm:$0x1]
      %v436 = vlaneseq
      %v437 = vshrl.u32 %v436, 7
      %v438 = vsub.s32 0, %v437
      %v439 = vrot.slane %v434, %v438
      %v445 = vunpack.c.l.b16 %v429
      %v446 = vunpack.c.l.b16 %v430
      %v447 = vunpack.c.l.b16 %v431
      %v448 = vunpack.c.l.b16 %v432
      %v449 = vpack.c.b16 %v446, %v445
      %v450 = vpack.c.b16 %v448, %v447
      %vm453 = vcmask 261120
      %v455 = vsel %vm453, %v433, 0
      %457 = vmatprep.subr.bf16.mxu0 0
      %458 = vmatpush1.bf16.msra.mxu0 %v449
      %459 = vmatprep.subr.bf16.mxu0 0
      %460 = vmatpush1.bf16.msra.mxu0 %v450
      %461 = vmatprep.subr.bf16.mxu0 0
      %462 = vmatpush1.bf16.msra.mxu0 0
      %463 = vmatprep.subr.bf16.mxu0 0
      %464 = vmatpush1.bf16.msra.mxu0 0
      %465 = vmatprep.subr.bf16.mxu0 0
      %466 = vmatpush1.bf16.msra.mxu0 0
      %467 = vmatprep.subr.bf16.mxu0 0
      %468 = vmatpush1.bf16.msra.mxu0 0
      %469 = vmatprep.subr.bf16.mxu0 0
      %470 = vmatpush1.bf16.msra.mxu0 0
      %471 = vmatprep.subr.bf16.mxu0 0
      %472 = vmatpush1.bf16.msra.mxu0 0
      %473 = vmatprep.subr.bf16.mxu0 0
      %474 = vmatpush1.bf16.msra.mxu0 0
      %475 = vmatprep.subr.bf16.mxu0 0
      %476 = vmatpush1.bf16.msra.mxu0 0
      %477 = vmatprep.subr.bf16.mxu0 0
      %478 = vmatpush1.bf16.msra.mxu0 0
      %479 = vmatprep.subr.bf16.mxu0 0
      %480 = vmatpush1.bf16.msra.mxu0 0
      %481 = vmatprep.subr.bf16.mxu0 0
      %482 = vmatpush1.bf16.msra.mxu0 0
      %483 = vmatprep.subr.bf16.mxu0 0
      %484 = vmatpush1.bf16.msra.mxu0 0
      %485 = vmatprep.subr.bf16.mxu0 0
      %486 = vmatpush1.bf16.msra.mxu0 0
      %487 = vmatprep.subr.bf16.mxu0 0
      %488 = vmatpush1.bf16.msra.mxu0 0
      %489 = vmatprep.mubr.bf16.mxu0 0
      %490 = vmatmul.mubr.bf16.gmra.mrb[0].mxu0 %v455
      %v491 = vpop.f32.mrb[0].mxu0
      %v492 = vadd.f32 %v439, %v491
      %v493 = vpop.f32.mrb[0].mxu0
      %v494 = vpop.f32.mrb[0].mxu0
      %v495 = vpop.f32.mrb[0].mxu0
      %496 = vdwg.mxu0
      %v497 = vmax.f32 %v492, 0.0
      %v498 = vld [vmem:[%s4] sm:$0xf]
      %v499 = vld [vmem:[%s4 + $0x4] sm:$0xf]
      %v500 = vld [vmem:[%s4 + $0x8] sm:$0xf]
      %v501 = vld [vmem:[%s4 + $0xc] sm:$0xf]
      %v502 = vld [vmem:[%s4 + $0x10] sm:$0xf]
      %v503 = vld [vmem:[%s4 + $0x14] sm:$0xf]
      %v504 = vld [vmem:[%s4 + $0x18] sm:$0xf]
      %v505 = vld [vmem:[%s4 + $0x1c] sm:$0xf]
      %v506 = vpack.c.bf16 %v497, %v497
      %v507 = vld [vmem:[%s5] sm:$0x1]
      %v509 = vlaneseq
      %v510 = vshrl.u32 %v509, 7
      %v511 = vsub.s32 0, %v510
      %v512 = vrot.slane %v507, %v511
      %v522 = vunpack.c.l.b16 %v498
      %v523 = vunpack.c.l.b16 %v499
      %v524 = vunpack.c.l.b16 %v500
      %v525 = vunpack.c.l.b16 %v501
      %v526 = vunpack.c.l.b16 %v502
      %v527 = vunpack.c.l.b16 %v503
      %v528 = vunpack.c.l.b16 %v504
      %v529 = vunpack.c.l.b16 %v505
      %v530 = vpack.c.b16 %v523, %v522
      %v531 = vpack.c.b16 %v525, %v524
      %v532 = vpack.c.b16 %v527, %v526
      %v533 = vpack.c.b16 %v529, %v528
      %vm538 = vcmask 523264
      %v540 = vsel %vm538, %v506, 0
      %542 = vmatprep.subr.bf16.mxu0 0
      %543 = vmatpush1.bf16.msra.mxu0 %v530
      %544 = vmatprep.subr.bf16.mxu0 0
      %545 = vmatpush1.bf16.msra.mxu0 %v531
      %546 = vmatprep.subr.bf16.mxu0 0
      %547 = vmatpush1.bf16.msra.mxu0 %v532
      %548 = vmatprep.subr.bf16.mxu0 0
      %549 = vmatpush1.bf16.msra.mxu0 %v533
      %550 = vmatprep.subr.bf16.mxu0 0
      %551 = vmatpush1.bf16.msra.mxu0 0
      %552 = vmatprep.subr.bf16.mxu0 0
      %553 = vmatpush1.bf16.msra.mxu0 0
      %554 = vmatprep.subr.bf16.mxu0 0
      %555 = vmatpush1.bf16.msra.mxu0 0
      %556 = vmatprep.subr.bf16.mxu0 0
      %557 = vmatpush1.bf16.msra.mxu0 0
      %558 = vmatprep.subr.bf16.mxu0 0
      %559 = vmatpush1.bf16.msra.mxu0 0
      %560 = vmatprep.subr.bf16.mxu0 0
      %561 = vmatpush1.bf16.msra.mxu0 0
      %562 = vmatprep.subr.bf16.mxu0 0
      %563 = vmatpush1.bf16.msra.mxu0 0
      %564 = vmatprep.subr.bf16.mxu0 0
      %565 = vmatpush1.bf16.msra.mxu0 0
      %566 = vmatprep.subr.bf16.mxu0 0
      %567 = vmatpush1.bf16.msra.mxu0 0
      %568 = vmatprep.subr.bf16.mxu0 0
      %569 = vmatpush1.bf16.msra.mxu0 0
      %570 = vmatprep.subr.bf16.mxu0 0
      %571 = vmatpush1.bf16.msra.mxu0 0
      %572 = vmatprep.subr.bf16.mxu0 0
      %573 = vmatpush1.bf16.msra.mxu0 0
      %574 = vmatprep.mubr.bf16.mxu0 0
      %575 = vmatmul.mubr.bf16.gmra.mrb[0].mxu0 %v540
      %v576 = vpop.f32.mrb[0].mxu0
      %v577 = vadd.f32 %v512, %v576
      %v578 = vpop.f32.mrb[0].mxu0
      %v579 = vpop.f32.mrb[0].mxu0
      %v580 = vpop.f32.mrb[0].mxu0
      %581 = vdwg.mxu0
      %v582 = vmul.f32 %v577, 0.5
      %v583 = vmul.f32 %v582, 1.442695
      %v584 = vpow.pop %v583
      %586 = vrot.lane.b32.xlu0 %v428, 16
      %v587 = vpop.permute.xlu0 %586
      %v589 = vmul.f32 %v584, %v587
      %591 = vrot.lane.b32.xlu0 %v589, 112
      %v592 = vpop.permute.xlu0 %591
      %v594 = vadd.f32 %v577, %v592
      %v595 = vld [vmem:[%s6] sm:$0xf]
      %v596 = vld [vmem:[%s6 + $0x4] sm:$0xf]
      %v597 = vpack.c.bf16 %v594, %v594
      %v598 = vld [vmem:[%s7] sm:$0x1]
      %v600 = vlaneseq
      %v601 = vshrl.u32 %v600, 7
      %v602 = vsub.s32 0, %v601
      %v603 = vrot.slane %v598, %v602
      %v607 = vunpack.c.l.b16 %v595
      %v608 = vunpack.c.l.b16 %v596
      %v609 = vpack.c.b16 %v608, %v607
      %vm611 = vcmask 130048
      %v613 = vsel %vm611, %v597, 0
      %615 = vmatprep.subr.bf16.mxu0 0
      %616 = vmatpush1.bf16.msra.mxu0 %v609
      %617 = vmatprep.subr.bf16.mxu0 0
      %618 = vmatpush1.bf16.msra.mxu0 0
      %619 = vmatprep.subr.bf16.mxu0 0
      %620 = vmatpush1.bf16.msra.mxu0 0
      %621 = vmatprep.subr.bf16.mxu0 0
      %622 = vmatpush1.bf16.msra.mxu0 0
      %623 = vmatprep.subr.bf16.mxu0 0
      %624 = vmatpush1.bf16.msra.mxu0 0
      %625 = vmatprep.subr.bf16.mxu0 0
      %626 = vmatpush1.bf16.msra.mxu0 0
      %627 = vmatprep.subr.bf16.mxu0 0
      %628 = vmatpush1.bf16.msra.mxu0 0
      %629 = vmatprep.subr.bf16.mxu0 0
      %630 = vmatpush1.bf16.msra.mxu0 0
      %631 = vmatprep.subr.bf16.mxu0 0
      %632 = vmatpush1.bf16.msra.mxu0 0
      %633 = vmatprep.subr.bf16.mxu0 0
      %634 = vmatpush1.bf16.msra.mxu0 0
      %635 = vmatprep.subr.bf16.mxu0 0
      %636 = vmatpush1.bf16.msra.mxu0 0
      %637 = vmatprep.subr.bf16.mxu0 0
      %638 = vmatpush1.bf16.msra.mxu0 0
      %639 = vmatprep.subr.bf16.mxu0 0
      %640 = vmatpush1.bf16.msra.mxu0 0
      %641 = vmatprep.subr.bf16.mxu0 0
      %642 = vmatpush1.bf16.msra.mxu0 0
      %643 = vmatprep.subr.bf16.mxu0 0
      %644 = vmatpush1.bf16.msra.mxu0 0
      %645 = vmatprep.subr.bf16.mxu0 0
      %646 = vmatpush1.bf16.msra.mxu0 0
      %647 = vmatprep.mubr.bf16.mxu0 0
      %648 = vmatmul.mubr.bf16.gmra.mrb[0].mxu0 %v613
      %v649 = vpop.f32.mrb[0].mxu0
      %v650 = vadd.f32 %v603, %v649
      %v651 = vpop.f32.mrb[0].mxu0
      %v652 = vpop.f32.mrb[0].mxu0
      %v653 = vpop.f32.mrb[0].mxu0
      %654 = vdwg.mxu0
      %v655 = vtanh.pop %v650
      %v656 = vld [vmem:[%s8] sm:$0xf]
      %v657 = vld [vmem:[%s8 + $0x4] sm:$0xf]
      %v658 = vpack.c.bf16 %v655, %v655
      %v659 = vld [vmem:[%s9] sm:$0x1]
      %v661 = vlaneseq
      %v662 = vshrl.u32 %v661, 7
      %v663 = vsub.s32 0, %v662
      %v664 = vrot.slane %v659, %v663
      %v668 = vunpack.c.l.b16 %v656
      %v669 = vunpack.c.l.b16 %v657
      %v670 = vpack.c.b16 %v669, %v668
      %v673 = vsel %vm611, %v658, 0
      %675 = vmatprep.subr.bf16.mxu0 0
      %676 = vmatpush1.bf16.msra.mxu0 %v670
      %677 = vmatprep.subr.bf16.mxu0 0
      %678 = vmatpush1.bf16.msra.mxu0 0
      %679 = vmatprep.subr.bf16.mxu0 0
      %680 = vmatpush1.bf16.msra.mxu0 0
      %681 = vmatprep.subr.bf16.mxu0 0
      %682 = vmatpush1.bf16.msra.mxu0 0
      %683 = vmatprep.subr.bf16.mxu0 0
      %684 = vmatpush1.bf16.msra.mxu0 0
      %685 = vmatprep.subr.bf16.mxu0 0
      %686 = vmatpush1.bf16.msra.mxu0 0
      %687 = vmatprep.subr.bf16.mxu0 0
      %688 = vmatpush1.bf16.msra.mxu0 0
      %689 = vmatprep.subr.bf16.mxu0 0
      %690 = vmatpush1.bf16.msra.mxu0 0
      %691 = vmatprep.subr.bf16.mxu0 0
      %692 = vmatpush1.bf16.msra.mxu0 0
      %693 = vmatprep.subr.bf16.mxu0 0
      %694 = vmatpush1.bf16.msra.mxu0 0
      %695 = vmatprep.subr.bf16.mxu0 0
      %696 = vmatpush1.bf16.msra.mxu0 0
      %697 = vmatprep.subr.bf16.mxu0 0
      %698 = vmatpush1.bf16.msra.mxu0 0
      %699 = vmatprep.subr.bf16.mxu0 0
      %700 = vmatpush1.bf16.msra.mxu0 0
      %701 = vmatprep.subr.bf16.mxu0 0
      %702 = vmatpush1.bf16.msra.mxu0 0
      %703 = vmatprep.subr.bf16.mxu0 0
      %704 = vmatpush1.bf16.msra.mxu0 0
      %705 = vmatprep.subr.bf16.mxu0 0
      %706 = vmatpush1.bf16.msra.mxu0 0
      %707 = vmatprep.mubr.bf16.mxu0 0
      %708 = vmatmul.mubr.bf16.gmra.mrb[0].mxu0 %v673
      %v709 = vpop.f32.mrb[0].mxu0
      %v710 = vadd.f32 %v664, %v709
      %v711 = vpop.f32.mrb[0].mxu0
      %v712 = vpop.f32.mrb[0].mxu0
      %v713 = vpop.f32.mrb[0].mxu0
      %714 = vdwg.mxu0
      %v715 = vmax.f32 %v710, 0.0
      %v716 = vld [vmem:[%s10] sm:$0xf]
      %v717 = vld [vmem:[%s10 + $0x4] sm:$0xf]
      %v718 = vld [vmem:[%s10 + $0x8] sm:$0xf]
      %v719 = vld [vmem:[%s10 + $0xc] sm:$0xf]
      %v720 = vld [vmem:[%s10 + $0x10] sm:$0xf]
      %v721 = vld [vmem:[%s10 + $0x14] sm:$0xf]
      %v722 = vld [vmem:[%s10 + $0x18] sm:$0xf]
      %v723 = vld [vmem:[%s10 + $0x1c] sm:$0xf]
      %v724 = vpack.c.bf16 %v715, %v715
      %v725 = vld [vmem:[%s11] sm:$0x1]
      %v727 = vlaneseq
      %v728 = vshrl.u32 %v727, 7
      %v729 = vsub.s32 0, %v728
      %v730 = vrot.slane %v725, %v729
      %v740 = vunpack.c.l.b16 %v716
      %v741 = vunpack.c.l.b16 %v717
      %v742 = vunpack.c.l.b16 %v718
      %v743 = vunpack.c.l.b16 %v719
      %v744 = vunpack.c.l.b16 %v720
      %v745 = vunpack.c.l.b16 %v721
      %v746 = vunpack.c.l.b16 %v722
      %v747 = vunpack.c.l.b16 %v723
      %v748 = vpack.c.b16 %v741, %v740
      %v749 = vpack.c.b16 %v743, %v742
      %v750 = vpack.c.b16 %v745, %v744
      %v751 = vpack.c.b16 %v747, %v746
      %v757 = vsel %vm538, %v724, 0
      %759 = vmatprep.subr.bf16.mxu0 0
      %760 = vmatpush1.bf16.msra.mxu0 %v748
      %761 = vmatprep.subr.bf16.mxu0 0
      %762 = vmatpush1.bf16.msra.mxu0 %v749
      %763 = vmatprep.subr.bf16.mxu0 0
      %764 = vmatpush1.bf16.msra.mxu0 %v750
      %765 = vmatprep.subr.bf16.mxu0 0
      %766 = vmatpush1.bf16.msra.mxu0 %v751
      %767 = vmatprep.subr.bf16.mxu0 0
      %768 = vmatpush1.bf16.msra.mxu0 0
      %769 = vmatprep.subr.bf16.mxu0 0
      %770 = vmatpush1.bf16.msra.mxu0 0
      %771 = vmatprep.subr.bf16.mxu0 0
      %772 = vmatpush1.bf16.msra.mxu0 0
      %773 = vmatprep.subr.bf16.mxu0 0
      %774 = vmatpush1.bf16.msra.mxu0 0
      %775 = vmatprep.subr.bf16.mxu0 0
      %776 = vmatpush1.bf16.msra.mxu0 0
      %777 = vmatprep.subr.bf16.mxu0 0
      %778 = vmatpush1.bf16.msra.mxu0 0
      %779 = vmatprep.subr.bf16.mxu0 0
      %780 = vmatpush1.bf16.msra.mxu0 0
      %781 = vmatprep.subr.bf16.mxu0 0
      %782 = vmatpush1.bf16.msra.mxu0 0
      %783 = vmatprep.subr.bf16.mxu0 0
      %784 = vmatpush1.bf16.msra.mxu0 0
      %785 = vmatprep.subr.bf16.mxu0 0
      %786 = vmatpush1.bf16.msra.mxu0 0
      %787 = vmatprep.subr.bf16.mxu0 0
      %788 = vmatpush1.bf16.msra.mxu0 0
      %789 = vmatprep.subr.bf16.mxu0 0
      %790 = vmatpush1.bf16.msra.mxu0 0
      %791 = vmatprep.mubr.bf16.mxu0 0
      %792 = vmatmul.mubr.bf16.gmra.mrb[0].mxu0 %v757
      %v793 = vpop.f32.mrb[0].mxu0
      %v794 = vadd.f32 %v730, %v793
      %v795 = vpop.f32.mrb[0].mxu0
      %v796 = vpop.f32.mrb[0].mxu0
      %v797 = vpop.f32.mrb[0].mxu0
      %798 = vdwg.mxu0
      %799 = vst.msk [vmem:[%s425] sm:$0xff] %vm611, %v577
      %vm800 = vcmask 261248
      %801 = vst.msk [vmem:[%s425] sm:$0xff] %vm800, %v584
      %803 = vrot.lane.b32.xlu0 %v594, 32
      %v804 = vpop.permute.xlu0 %803
      %vm806 = vcmask 392448
      %807 = vst.msk [vmem:[%s425] sm:$0xff] %vm806, %v804
      %809 = vrot.lane.b32.xlu0 %v794, 48
      %v810 = vpop.permute.xlu0 %809
      %vm812 = vcmask 654720
      %813 = vst.msk [vmem:[%s425] sm:$0xff] %vm812, %v810
      %vm814 = vcmask 1048192
      %815 = vst.msk [vmem:[%s425] sm:$0xff] %vm814, 0.0
      %p816 = scmp.lt.s32.totalorder %s23, 1
      %s817 = scalar_select %p816, %s23, 1
      %s818 = smul.addr %s817, 8
      %s819 = scalar_lea.vmem %s12, %s818
      // Predicated region
      $region69: #{dvae_forward.1} parent=67 // pred_check
        %p820 = pneg %p303
      $region70: #{dvae_forward.1} parent=67 // pred_check_branch
        %822 = sbr.rel (%p820) target = $region72
      $region71: #{dvae_forward.1} parent=67 // pred_region
        _
      $region72: #{dvae_forward.1} parent=67 // pred_fallthru
        _
    $region68: #{dvae_forward.1} parent=5 // pred_fallthru
      _
    %p823 = scmp.le.s32.totalorder 2, %s18
    // Predicated region
    $region73: #{dvae_forward.1} parent=5 // pred_check
      %p824 = pneg %p823
    $region74: #{dvae_forward.1} parent=5 // pred_check_branch
      %826 = sbr.rel (%p824) target = $region76
    $region75: #{dvae_forward.1} parent=5 // pred_region
      %s827 = ssub.s32 %s18, 2
      // Predicated region
      $region77: #{dvae_forward.1} parent=75 // pred_check
        %p828 = pneg %p309
      $region78: #{dvae_forward.1} parent=75 // pred_check_branch
        %830 = sbr.rel (%p828) target = $region80
      $region79: #{dvae_forward.1} parent=75 // pred_region
        %p831 = scmp.lt.s32.totalorder %s24, 1
        %s832 = scalar_select %p831, %s24, 1
        %s833 = smul.addr %s832, 8
        %s834 = scalar_lea.vmem %s12, %s833
      $region80: #{dvae_forward.1} parent=75 // pred_fallthru
        _
    $region76: #{dvae_forward.1} parent=5 // pred_fallthru
      _
  $region6: #{dvae_forward.1} parent=0 // loop_footer
    %s22 = sadd.s32 1, %s18
  $region7: #{dvae_forward.1} parent=0 // loop_footer_branch
    %17 = sbr.rel target = $region3
  $region8: #{dvae_forward.1} parent=0 // loop_exit
    _

</llo_original>
